<compile_context>
chip_gen: v7x
topology: tpu7x:2x2x1
jax: 0.10.0
libtpu: 0.0.40
codegen_flags: <defaults>
</compile_context>

<pallas_src>
import functools

import jax
import jax.numpy as jnp
from jax.experimental import pallas as pl
from jax.experimental.pallas import tpu as pltpu


def _round_up(x: int, m: int) -> int:
    return ((x + m - 1) // m) * m


def _mlp_kernel(x_ref, *refs, num_layers: int, out_rows: int, precision):
    """Fused MLP forward for one batch tile (transposed layout).

    x_ref:  [D0p, Btile]   activations, features on sublanes, batch on lanes
    refs:   w0 [D1p, D0p], b0 [D1p, 1], w1, b1, ..., o_ref [out_rows, Btile]
    Weights are in (out_features, in_features) layout; all in-feature dims are
    padded to multiples of 128 (lane-dense weight loads, aligned MXU K dim).
    """
    o_ref = refs[-1]
    h = x_ref[...]                                    # (D0p, Btile)
    for l in range(num_layers):
        w = refs[2 * l][...]                          # (Doutp, Dinp) compute dtype
        b = refs[2 * l + 1][...]                      # (Doutp, 1)    float32
        h = jnp.dot(w, h.astype(w.dtype),
                    preferred_element_type=jnp.float32,
                    precision=precision) + b          # f32 accumulation + bias
        if l != num_layers - 1:
            h = jnp.maximum(h, 0.0)                   # ReLU (VPU)
    # Lane-dense store of exactly the real output rows (Dout=1 for this module).
    o_ref[...] = h[:out_rows, :].astype(o_ref.dtype)


def prepare_nn_params(params, compute_dtype=jnp.bfloat16):
    """Pad / transpose the parameters ONCE (do this at init time, reuse forever).

    params: list of (w [Din, Dout], b [Dout]) in math layout (y = x @ w + b).
    Returns padded weights in (out, in) layout cast to `compute_dtype`,
    float32 biases of shape (Doutp, 1), plus the dimension metadata.
    """
    num_layers = len(params)
    dims = [params[0][0].shape[0]] + [w.shape[1] for (w, _) in params]
    final_dout = dims[-1]

    # In-feature dims (lane dim of W, sublane dim of h): multiples of 128.
    p_in = tuple(_round_up(d, 128) for d in dims[:-1])
    # Out-feature dims: hidden ones feed the next layer -> 128-aligned;
    # the final one only needs sublane (8) alignment.
    p_out = tuple(list(p_in[1:]) + [_round_up(final_dout, 8)])

    flat = []
    for l, (w, b) in enumerate(params):
        din, dout = w.shape
        wt = jnp.zeros((p_out[l], p_in[l]), compute_dtype)
        wt = wt.at[:dout, :din].set(w.T.astype(compute_dtype))      # torch (out,in) layout
        bp = jnp.zeros((p_out[l], 1), jnp.float32).at[:dout, 0].set(
            b.astype(jnp.float32))
        flat += [wt, bp]

    return {
        "flat": tuple(flat),
        "num_layers": num_layers,
        "input_size": dims[0],
        "final_dout": final_dout,
        "p_in": p_in,
        "p_out": p_out,
        "compute_dtype": compute_dtype,
    }


def nn_forward(prep, x, *, max_batch_tile=512):
    """Forward pass using one fused Pallas kernel.  `prep` = prepare_nn_params(...)."""
    B, Din = x.shape
    assert Din == prep["input_size"]
    num_layers = prep["num_layers"]
    p_in, p_out = prep["p_in"], prep["p_out"]
    final_dout = prep["final_dout"]
    cdt = prep["compute_dtype"]

    # ---- Batch tiling: batch lives on LANES -> tiles are multiples of 128. ----
    # Guarantee >=2 grid steps when the batch allows it, so the "parallel"
    # semantics can shard the grid across v7x's two TensorCores.
    Bp = _round_up(B, 128)
    n_tiles = max(1, pl.cdiv(Bp, max_batch_tile))
    if n_tiles == 1 and Bp >= 256:
        n_tiles = 2
    Btile = _round_up(pl.cdiv(Bp, n_tiles), 128)
    Bpad = Btile * n_tiles

    # Transposed, padded input: (D0p, Bpad).  Single jnp.pad pass.
    xT = jnp.pad(x.T.astype(cdt), ((0, p_in[0] - Din), (0, Bpad - B)))

    # ---- BlockSpecs ----
    in_specs = [pl.BlockSpec((p_in[0], Btile), lambda i: (0, i))]
    for l in range(num_layers):
        # Resident weights/biases: constant block index, single-buffered.
        in_specs.append(pl.BlockSpec((p_out[l], p_in[l]), lambda i: (0, 0),
                                     pipeline_mode=pl.Buffered(1)))
        in_specs.append(pl.BlockSpec((p_out[l], 1), lambda i: (0, 0),
                                     pipeline_mode=pl.Buffered(1)))
    out_specs = pl.BlockSpec((final_dout, Btile), lambda i: (0, i))

    # ---- Cost estimate & explicit VMEM budget ----
    itemsize_c = jnp.dtype(cdt).itemsize
    w_bytes = sum(p_out[l] * p_in[l] * itemsize_c for l in range(num_layers))
    b_bytes = sum(p_out[l] * 128 * 4 for l in range(num_layers))  # lane-padded in VMEM
    x_tile_bytes = 2 * p_in[0] * Btile * itemsize_c               # double-buffered stream
    o_tile_bytes = 2 * _round_up(final_dout, 8) * Btile * 4
    act_bytes = 2 * max(p_in + p_out) * Btile * 4                 # carried activations
    vmem_needed = w_bytes + b_bytes + x_tile_bytes + o_tile_bytes + act_bytes
    vmem_limit = int(min(max(vmem_needed + (4 << 20), 16 << 20), 64 << 20))

    flops = 2 * Bpad * sum(p_out[l] * p_in[l] for l in range(num_layers))
    bytes_accessed = (xT.size * itemsize_c + w_bytes
                      + sum(p_out[l] * 4 for l in range(num_layers))
                      + final_dout * Bpad * 4)

    precision = (jax.lax.Precision.HIGHEST
                 if jnp.dtype(cdt) == jnp.dtype(jnp.float32) else None)
    kernel = functools.partial(_mlp_kernel, num_layers=num_layers,
                               out_rows=final_dout, precision=precision)

    out_t = pl.pallas_call(
        kernel,
        out_shape=jax.ShapeDtypeStruct((final_dout, Bpad), jnp.float32),
        grid=(n_tiles,),
        in_specs=in_specs,
        out_specs=out_specs,
        compiler_params=pltpu.CompilerParams(
            dimension_semantics=("parallel",),
            vmem_limit_bytes=vmem_limit,
        ),
        cost_estimate=pl.CostEstimate(
            flops=flops, transcendentals=0, bytes_accessed=bytes_accessed),
    )(xT, *prep["flat"])

    # (final_dout, Bpad) -> (B, final_dout); tiny slice/transpose of the dense result.
    return out_t[:, :B].T


def init_nn_params(key, input_size, hidden_layer_width):
    """Deterministic init mirroring nn.Linear default
    (uniform(-1/sqrt(fan_in), +1/sqrt(fan_in))), stored in math layout
    (w: [in_features, out_features]) so y = x @ w + b."""
    sizes = [input_size] + list(hidden_layer_width) + [1]
    params = []
    for i in range(len(sizes) - 1):
        fan_in, fan_out = sizes[i], sizes[i + 1]
        key, kw, kb = jax.random.split(key, 3)
        bound = 1.0 / jnp.sqrt(float(fan_in))
        w = jax.random.uniform(kw, (fan_in, fan_out), jnp.float32, -bound, bound)
        b = jax.random.uniform(kb, (fan_out,), jnp.float32, -bound, bound)
        params.append((w, b))
    return params


def nn_forward_reference(params, x):
    """Plain-JAX f32 reference (true f32 matmuls)."""
    n = len(params)
    h = x
    for idx, (w, b) in enumerate(params):
        h = jnp.dot(h, w, precision=jax.lax.Precision.HIGHEST) + b
        if idx != n - 1:
            h = jnp.maximum(h, 0.0)
    return h


if __name__ == "__main__":
    key = jax.random.PRNGKey(0)
    key, kx = jax.random.split(key)

    # Small shapes consistent with the module's forward pass.
    batch = 8
    input_size = 16
    config = {"hidden_layer_width": [32, 32]}

    x = jax.random.normal(kx, (batch, input_size), jnp.float32)
    params = init_nn_params(key, input_size, config["hidden_layer_width"])
    ref = nn_forward_reference(params, x)

    # Default fast path: bf16 MXU inputs, f32 accumulation.
    prep_bf16 = prepare_nn_params(params, compute_dtype=jnp.bfloat16)
    out_bf16 = jax.block_until_ready(nn_forward(prep_bf16, x))
    assert out_bf16.shape == (batch, 1), out_bf16.shape
    assert jnp.allclose(out_bf16, ref, atol=3e-2, rtol=3e-2), "bf16 path mismatch"

    # f32 path (precision=HIGHEST) for bit-accurate parity with the PyTorch module.
    prep_f32 = prepare_nn_params(params, compute_dtype=jnp.float32)
    out_f32 = jax.block_until_ready(nn_forward(prep_f32, x))
    assert out_f32.shape == (batch, 1), out_f32.shape
    assert jnp.allclose(out_f32, ref, atol=1e-5, rtol=1e-5), "f32 path mismatch"

    print("KERNEL_OK")
</pallas_src>

<mosaic_0001>
module attributes {stable_mosaic.version = 11 : i64} {
  func.func @_mlp_kernel(%arg0: i32, %arg1: memref<128x128xbf16, #tpu.memory_space<vmem>>, %arg2: memref<128x128xbf16, #tpu.memory_space<vmem>>, %arg3: memref<128x1xf32, #tpu.memory_space<vmem>>, %arg4: memref<128x128xbf16, #tpu.memory_space<vmem>>, %arg5: memref<128x1xf32, #tpu.memory_space<vmem>>, %arg6: memref<8x128xbf16, #tpu.memory_space<vmem>>, %arg7: memref<8x1xf32, #tpu.memory_space<vmem>>, %arg8: memref<1x128xf32, #tpu.memory_space<vmem>>) attributes {dimension_semantics = [#tpu.dimension_semantics<parallel>], iteration_bounds = array<i64: 1>, scalar_prefetch = 0 : i64, scratch_operands = 0 : i64, tpu.core_type = #tpu.core_type<tc>, window_params = [{transform_indices = @transform_0, window_bounds = array<i64: 128, 128>}, {pipeline_mode = #tpu.pipeline_mode<synchronous>, transform_indices = @transform_1, window_bounds = array<i64: 128, 128>}, {pipeline_mode = #tpu.pipeline_mode<synchronous>, transform_indices = @transform_2, window_bounds = array<i64: 128, 1>}, {pipeline_mode = #tpu.pipeline_mode<synchronous>, transform_indices = @transform_3, window_bounds = array<i64: 128, 128>}, {pipeline_mode = #tpu.pipeline_mode<synchronous>, transform_indices = @transform_4, window_bounds = array<i64: 128, 1>}, {pipeline_mode = #tpu.pipeline_mode<synchronous>, transform_indices = @transform_5, window_bounds = array<i64: 8, 128>}, {pipeline_mode = #tpu.pipeline_mode<synchronous>, transform_indices = @transform_6, window_bounds = array<i64: 8, 1>}, {transform_indices = @transform_7, window_bounds = array<i64: 1, 128>}]} {
    %c0 = arith.constant 0 : index
    %c0_0 = arith.constant 0 : index
    %0 = vector.load %arg1[%c0, %c0_0] : memref<128x128xbf16, #tpu.memory_space<vmem>>, vector<128x128xbf16>
    %c0_1 = arith.constant 0 : index
    %c0_2 = arith.constant 0 : index
    %1 = vector.load %arg2[%c0_1, %c0_2] : memref<128x128xbf16, #tpu.memory_space<vmem>>, vector<128x128xbf16>
    %c0_3 = arith.constant 0 : index
    %c0_4 = arith.constant 0 : index
    %2 = vector.load %arg3[%c0_3, %c0_4] : memref<128x1xf32, #tpu.memory_space<vmem>>, vector<128x1xf32>
    %cst = arith.constant dense<0.000000e+00> : vector<128x128xf32>
    %3 = tpu.matmul %1, %0, %cst {dimension_numbers = #tpu.dot_dimension_numbers<[1], [0], [0], [1], [0, 0, 1, 1], [], []>} : vector<128x128xbf16>, vector<128x128xbf16>, vector<128x128xf32> -> vector<128x128xf32>
    %4 = vector.broadcast %2 : vector<128x1xf32> to vector<128x128xf32>
    %5 = arith.addf %3, %4 : vector<128x128xf32>
    %cst_5 = arith.constant 0.000000e+00 : f32
    %6 = vector.broadcast %cst_5 : f32 to vector<128x128xf32>
    %7 = arith.maximumf %5, %6 : vector<128x128xf32>
    %c0_6 = arith.constant 0 : index
    %c0_7 = arith.constant 0 : index
    %8 = vector.load %arg4[%c0_6, %c0_7] : memref<128x128xbf16, #tpu.memory_space<vmem>>, vector<128x128xbf16>
    %c0_8 = arith.constant 0 : index
    %c0_9 = arith.constant 0 : index
    %9 = vector.load %arg5[%c0_8, %c0_9] : memref<128x1xf32, #tpu.memory_space<vmem>>, vector<128x1xf32>
    %10 = arith.truncf %7 : vector<128x128xf32> to vector<128x128xbf16>
    %cst_10 = arith.constant dense<0.000000e+00> : vector<128x128xf32>
    %11 = tpu.matmul %8, %10, %cst_10 {dimension_numbers = #tpu.dot_dimension_numbers<[1], [0], [0], [1], [0, 0, 1, 1], [], []>} : vector<128x128xbf16>, vector<128x128xbf16>, vector<128x128xf32> -> vector<128x128xf32>
    %12 = vector.broadcast %9 : vector<128x1xf32> to vector<128x128xf32>
    %13 = arith.addf %11, %12 : vector<128x128xf32>
    %cst_11 = arith.constant 0.000000e+00 : f32
    %14 = vector.broadcast %cst_11 : f32 to vector<128x128xf32>
    %15 = arith.maximumf %13, %14 : vector<128x128xf32>
    %c0_12 = arith.constant 0 : index
    %c0_13 = arith.constant 0 : index
    %16 = vector.load %arg6[%c0_12, %c0_13] : memref<8x128xbf16, #tpu.memory_space<vmem>>, vector<8x128xbf16>
    %c0_14 = arith.constant 0 : index
    %c0_15 = arith.constant 0 : index
    %17 = vector.load %arg7[%c0_14, %c0_15] : memref<8x1xf32, #tpu.memory_space<vmem>>, vector<8x1xf32>
    %18 = arith.truncf %15 : vector<128x128xf32> to vector<128x128xbf16>
    %cst_16 = arith.constant dense<0.000000e+00> : vector<8x128xf32>
    %19 = tpu.matmul %16, %18, %cst_16 {dimension_numbers = #tpu.dot_dimension_numbers<[1], [0], [0], [1], [0, 0, 1, 1], [], []>} : vector<8x128xbf16>, vector<128x128xbf16>, vector<8x128xf32> -> vector<8x128xf32>
    %20 = vector.broadcast %17 : vector<8x1xf32> to vector<8x128xf32>
    %21 = arith.addf %19, %20 : vector<8x128xf32>
    %22 = vector.extract_strided_slice %21 {offsets = [0, 0], sizes = [1, 128], strides = [1, 1]} : vector<8x128xf32> to vector<1x128xf32>
    %c0_17 = arith.constant 0 : index
    %c0_18 = arith.constant 0 : index
    %23 = vector.load %arg8[%c0_17, %c0_18] : memref<1x128xf32, #tpu.memory_space<vmem>>, vector<1x128xf32>
    tpu.vector_store %arg8[%c0_17, %c0_18], %22 {strides = array<i32>} : memref<1x128xf32, #tpu.memory_space<vmem>>, vector<1x128xf32>,
    return
  }
  func.func @transform_0(%arg0: i32) -> (i32, i32) {
    %c0_i32 = arith.constant 0 : i32
    %c0_i32_0 = arith.constant 0 : i32
    return %c0_i32, %arg0 : i32, i32
  }
  func.func @transform_1(%arg0: i32) -> (i32, i32) {
    %c0_i32 = arith.constant 0 : i32
    %c0_i32_0 = arith.constant 0 : i32
    %c0_i32_1 = arith.constant 0 : i32
    return %c0_i32, %c0_i32_0 : i32, i32
  }
  func.func @transform_2(%arg0: i32) -> (i32, i32) {
    %c0_i32 = arith.constant 0 : i32
    %c0_i32_0 = arith.constant 0 : i32
    %c0_i32_1 = arith.constant 0 : i32
    return %c0_i32, %c0_i32_0 : i32, i32
  }
  func.func @transform_3(%arg0: i32) -> (i32, i32) {
    %c0_i32 = arith.constant 0 : i32
    %c0_i32_0 = arith.constant 0 : i32
    %c0_i32_1 = arith.constant 0 : i32
    return %c0_i32, %c0_i32_0 : i32, i32
  }
  func.func @transform_4(%arg0: i32) -> (i32, i32) {
    %c0_i32 = arith.constant 0 : i32
    %c0_i32_0 = arith.constant 0 : i32
    %c0_i32_1 = arith.constant 0 : i32
    return %c0_i32, %c0_i32_0 : i32, i32
  }
  func.func @transform_5(%arg0: i32) -> (i32, i32) {
    %c0_i32 = arith.constant 0 : i32
    %c0_i32_0 = arith.constant 0 : i32
    %c0_i32_1 = arith.constant 0 : i32
    return %c0_i32, %c0_i32_0 : i32, i32
  }
  func.func @transform_6(%arg0: i32) -> (i32, i32) {
    %c0_i32 = arith.constant 0 : i32
    %c0_i32_0 = arith.constant 0 : i32
    %c0_i32_1 = arith.constant 0 : i32
    return %c0_i32, %c0_i32_0 : i32, i32
  }
  func.func @transform_7(%arg0: i32) -> (i32, i32) {
    %c0_i32 = arith.constant 0 : i32
    %c0_i32_0 = arith.constant 0 : i32
    return %c0_i32, %arg0 : i32, i32
  }
}

</mosaic_0001>

<llo_original>
// kernel: tpu_custom_call.1
$region0: #{tpu_custom_call.1}
  #allocation0 [shape = 'u32[]', space=smem, size = 0x4, offset = 0x4, fixed_abs, tag = 'smem constant byte address 0x4 - core index']
  #allocation1 [shape = 'u32[144,128]{1,0:T(1,128)}', space=vmem, size = 0x12000, scoped, tag = 'internal scratch']
  %s0 = inlined_call_operand.vmem [shape: bf16[128,128], index: 0, kind: input, shape index: {}]
  %s1 = inlined_call_operand.vmem [shape: bf16[128,128], index: 1, kind: input, shape index: {}]
  %s2 = inlined_call_operand.vmem [shape: f32[128,1], index: 2, kind: input, shape index: {}]
  %s3 = inlined_call_operand.vmem [shape: bf16[128,128], index: 3, kind: input, shape index: {}]
  %s4 = inlined_call_operand.vmem [shape: f32[128,1], index: 4, kind: input, shape index: {}]
  %s5 = inlined_call_operand.vmem [shape: bf16[8,128], index: 5, kind: input, shape index: {}]
  %s6 = inlined_call_operand.vmem [shape: f32[8,1], index: 6, kind: input, shape index: {}]
  %s7 = inlined_call_operand.hbm [shape: f32[1,128], index: 7, kind: output, shape index: {}]
  %s8 = sld [smem:[#allocation0]]
  $region38: #{tpu_custom_call.1} parent=0
    _
  %s10 = ssub.s32 1, %s8
  %s11 = scalar_select 0, %s10, %s8
  $region1: #{tpu_custom_call.1} parent=0
    #allocation2 [shape = 'u8[512]{0}', space=vmem, size = 0x400, scoped, tag = 'output window, operand 0, single buffered']
    #allocation3 [shape = 's32[1]{0}', space=sflag, size = 0x4, scoped, tag = 'scoped memory for tpu_custom_call.1']
    %12 = vsyncpa [#allocation3], 0
    // Predicated region
    $region2: #{tpu_custom_call.1} parent=1 // pred_check
      _
    $region3: #{tpu_custom_call.1} parent=1 // pred_check_branch
      %14 = sbr.rel (0) target = $region5
    $region4: #{tpu_custom_call.1} parent=1 // pred_region
      _
    $region5: #{tpu_custom_call.1} parent=1 // pred_fallthru
      _
    // Predicated region
    $region6: #{tpu_custom_call.1} parent=1 // pred_check
      _
    $region7: #{tpu_custom_call.1} parent=1 // pred_check_branch
      %16 = sbr.rel (0) target = $region9
    $region8: #{tpu_custom_call.1} parent=1 // pred_region
      _
    $region9: #{tpu_custom_call.1} parent=1 // pred_fallthru
      _
    // Predicated region
    $region10: #{tpu_custom_call.1} parent=1 // pred_check
      _
    $region11: #{tpu_custom_call.1} parent=1 // pred_check_branch
      %18 = sbr.rel (0) target = $region13
    $region12: #{tpu_custom_call.1} parent=1 // pred_region
      _
    $region13: #{tpu_custom_call.1} parent=1 // pred_fallthru
      _
    // Predicated region
    $region14: #{tpu_custom_call.1} parent=1 // pred_check
      _
    $region15: #{tpu_custom_call.1} parent=1 // pred_check_branch
      %20 = sbr.rel (0) target = $region17
    $region16: #{tpu_custom_call.1} parent=1 // pred_region
      _
    $region17: #{tpu_custom_call.1} parent=1 // pred_fallthru
      _
    // Predicated region
    $region18: #{tpu_custom_call.1} parent=1 // pred_check
      _
    $region19: #{tpu_custom_call.1} parent=1 // pred_check_branch
      %22 = sbr.rel (0) target = $region21
    $region20: #{tpu_custom_call.1} parent=1 // pred_region
      _
    $region21: #{tpu_custom_call.1} parent=1 // pred_fallthru
      _
    // Predicated region
    $region22: #{tpu_custom_call.1} parent=1 // pred_check
      _
    $region23: #{tpu_custom_call.1} parent=1 // pred_check_branch
      %24 = sbr.rel (0) target = $region25
    $region24: #{tpu_custom_call.1} parent=1 // pred_region
      _
    $region25: #{tpu_custom_call.1} parent=1 // pred_fallthru
      _
    // Predicated region
    $region26: #{tpu_custom_call.1} parent=1 // pred_check
      _
    $region27: #{tpu_custom_call.1} parent=1 // pred_check_branch
      %26 = sbr.rel (0) target = $region29
    $region28: #{tpu_custom_call.1} parent=1 // pred_region
      _
    $region29: #{tpu_custom_call.1} parent=1 // pred_fallthru
      _
    %v28 = vld [vmem:[%s0] sm:$0xf]
    %v29 = vld [vmem:[%s0 + $0x4] sm:$0xf]
    %v30 = vld [vmem:[%s0 + $0x8] sm:$0xf]
    %v31 = vld [vmem:[%s0 + $0xc] sm:$0xf]
    %v32 = vld [vmem:[%s0 + $0x10] sm:$0xf]
    %v33 = vld [vmem:[%s0 + $0x14] sm:$0xf]
    %v34 = vld [vmem:[%s0 + $0x18] sm:$0xf]
    %v35 = vld [vmem:[%s0 + $0x1c] sm:$0xf]
    %v36 = vld [vmem:[%s0 + $0x20] sm:$0xf]
    %v37 = vld [vmem:[%s0 + $0x24] sm:$0xf]
    %v38 = vld [vmem:[%s0 + $0x28] sm:$0xf]
    %v39 = vld [vmem:[%s0 + $0x2c] sm:$0xf]
    %v40 = vld [vmem:[%s0 + $0x30] sm:$0xf]
    %v41 = vld [vmem:[%s0 + $0x34] sm:$0xf]
    %v42 = vld [vmem:[%s0 + $0x38] sm:$0xf]
    %v43 = vld [vmem:[%s0 + $0x3c] sm:$0xf]
    %v44 = vld [vmem:[%s1] sm:$0xf]
    %v45 = vld [vmem:[%s1 + $0x4] sm:$0xf]
    %v46 = vld [vmem:[%s1 + $0x8] sm:$0xf]
    %v47 = vld [vmem:[%s1 + $0xc] sm:$0xf]
    %v48 = vld [vmem:[%s1 + $0x10] sm:$0xf]
    %v49 = vld [vmem:[%s1 + $0x14] sm:$0xf]
    %v50 = vld [vmem:[%s1 + $0x18] sm:$0xf]
    %v51 = vld [vmem:[%s1 + $0x1c] sm:$0xf]
    %v52 = vld [vmem:[%s1 + $0x20] sm:$0xf]
    %v53 = vld [vmem:[%s1 + $0x24] sm:$0xf]
    %v54 = vld [vmem:[%s1 + $0x28] sm:$0xf]
    %v55 = vld [vmem:[%s1 + $0x2c] sm:$0xf]
    %v56 = vld [vmem:[%s1 + $0x30] sm:$0xf]
    %v57 = vld [vmem:[%s1 + $0x34] sm:$0xf]
    %v58 = vld [vmem:[%s1 + $0x38] sm:$0xf]
    %v59 = vld [vmem:[%s1 + $0x3c] sm:$0xf]
    %v60 = vld [vmem:[%s2] sm:$0xff]
    %v61 = vld [vmem:[%s2 + $0x8] sm:$0xff]
    %v62 = vld [vmem:[%s2 + $0x10] sm:$0xff]
    %v63 = vld [vmem:[%s2 + $0x18] sm:$0xff]
    %v64 = vld [vmem:[%s2 + $0x20] sm:$0xff]
    %v65 = vld [vmem:[%s2 + $0x28] sm:$0xff]
    %v66 = vld [vmem:[%s2 + $0x30] sm:$0xff]
    %v67 = vld [vmem:[%s2 + $0x38] sm:$0xff]
    %v68 = vld [vmem:[%s2 + $0x40] sm:$0xff]
    %v69 = vld [vmem:[%s2 + $0x48] sm:$0xff]
    %v70 = vld [vmem:[%s2 + $0x50] sm:$0xff]
    %v71 = vld [vmem:[%s2 + $0x58] sm:$0xff]
    %v72 = vld [vmem:[%s2 + $0x60] sm:$0xff]
    %v73 = vld [vmem:[%s2 + $0x68] sm:$0xff]
    %v74 = vld [vmem:[%s2 + $0x70] sm:$0xff]
    %v75 = vld [vmem:[%s2 + $0x78] sm:$0xff]
    %77 = vset.pattern.permute.xlu0 0
    %78 = vperm.xlu0 %77, %v60
    %v79 = vpop.permute.xlu0 %78
    %82 = vset.pattern.permute.xlu0 0
    %83 = vperm.xlu0 %82, %v61
    %v84 = vpop.permute.xlu0 %83
    %87 = vset.pattern.permute.xlu0 0
    %88 = vperm.xlu0 %87, %v62
    %v89 = vpop.permute.xlu0 %88
    %92 = vset.pattern.permute.xlu0 0
    %93 = vperm.xlu0 %92, %v63
    %v94 = vpop.permute.xlu0 %93
    %97 = vset.pattern.permute.xlu0 0
    %98 = vperm.xlu0 %97, %v64
    %v99 = vpop.permute.xlu0 %98
    %102 = vset.pattern.permute.xlu0 0
    %103 = vperm.xlu0 %102, %v65
    %v104 = vpop.permute.xlu0 %103
    %107 = vset.pattern.permute.xlu0 0
    %108 = vperm.xlu0 %107, %v66
    %v109 = vpop.permute.xlu0 %108
    %112 = vset.pattern.permute.xlu0 0
    %113 = vperm.xlu0 %112, %v67
    %v114 = vpop.permute.xlu0 %113
    %117 = vset.pattern.permute.xlu0 0
    %118 = vperm.xlu0 %117, %v68
    %v119 = vpop.permute.xlu0 %118
    %122 = vset.pattern.permute.xlu0 0
    %123 = vperm.xlu0 %122, %v69
    %v124 = vpop.permute.xlu0 %123
    %127 = vset.pattern.permute.xlu0 0
    %128 = vperm.xlu0 %127, %v70
    %v129 = vpop.permute.xlu0 %128
    %132 = vset.pattern.permute.xlu0 0
    %133 = vperm.xlu0 %132, %v71
    %v134 = vpop.permute.xlu0 %133
    %137 = vset.pattern.permute.xlu0 0
    %138 = vperm.xlu0 %137, %v72
    %v139 = vpop.permute.xlu0 %138
    %142 = vset.pattern.permute.xlu0 0
    %143 = vperm.xlu0 %142, %v73
    %v144 = vpop.permute.xlu0 %143
    %147 = vset.pattern.permute.xlu0 0
    %148 = vperm.xlu0 %147, %v74
    %v149 = vpop.permute.xlu0 %148
    %152 = vset.pattern.permute.xlu0 0
    %153 = vperm.xlu0 %152, %v75
    %v154 = vpop.permute.xlu0 %153
    %v172 = vunpack.c.l.b16 %v44
    %v173 = vunpack.c.l.b16 %v45
    %v174 = vunpack.c.l.b16 %v46
    %v175 = vunpack.c.l.b16 %v47
    %v176 = vunpack.c.l.b16 %v48
    %v177 = vunpack.c.l.b16 %v49
    %v178 = vunpack.c.l.b16 %v50
    %v179 = vunpack.c.l.b16 %v51
    %v180 = vunpack.c.l.b16 %v52
    %v181 = vunpack.c.l.b16 %v53
    %v182 = vunpack.c.l.b16 %v54
    %v183 = vunpack.c.l.b16 %v55
    %v184 = vunpack.c.l.b16 %v56
    %v185 = vunpack.c.l.b16 %v57
    %v186 = vunpack.c.l.b16 %v58
    %v187 = vunpack.c.l.b16 %v59
    %v188 = vpack.c.b16 %v173, %v172
    %v189 = vpack.c.b16 %v175, %v174
    %v190 = vpack.c.b16 %v177, %v176
    %v191 = vpack.c.b16 %v179, %v178
    %v192 = vpack.c.b16 %v181, %v180
    %v193 = vpack.c.b16 %v183, %v182
    %v194 = vpack.c.b16 %v185, %v184
    %v195 = vpack.c.b16 %v187, %v186
    %v220 = vunpack.c.l.b16 %v28
    %v221 = vunpack.c.l.b16 %v29
    %v222 = vunpack.c.l.b16 %v30
    %v223 = vunpack.c.l.b16 %v31
    %v224 = vunpack.c.l.b16 %v32
    %v225 = vunpack.c.l.b16 %v33
    %v226 = vunpack.c.l.b16 %v34
    %v227 = vunpack.c.l.b16 %v35
    %v228 = vunpack.c.l.b16 %v36
    %v229 = vunpack.c.l.b16 %v37
    %v230 = vunpack.c.l.b16 %v38
    %v231 = vunpack.c.l.b16 %v39
    %v232 = vunpack.c.l.b16 %v40
    %v233 = vunpack.c.l.b16 %v41
    %v234 = vunpack.c.l.b16 %v42
    %v235 = vunpack.c.l.b16 %v43
    %v236 = vpack.c.b16 %v221, %v220
    %v237 = vpack.c.b16 %v223, %v222
    %v238 = vpack.c.b16 %v225, %v224
    %v239 = vpack.c.b16 %v227, %v226
    %v240 = vpack.c.b16 %v229, %v228
    %v241 = vpack.c.b16 %v231, %v230
    %v242 = vpack.c.b16 %v233, %v232
    %v243 = vpack.c.b16 %v235, %v234
    %252 = vmatprep.subr.bf16.mxu0 0
    %253 = vmatpush1.bf16.msra.mxu0 %v236
    %254 = vmatprep.subr.bf16.mxu0 0
    %255 = vmatpush1.bf16.msra.mxu0 %v237
    %256 = vmatprep.subr.bf16.mxu0 0
    %257 = vmatpush1.bf16.msra.mxu0 %v238
    %258 = vmatprep.subr.bf16.mxu0 0
    %259 = vmatpush1.bf16.msra.mxu0 %v239
    %260 = vmatprep.subr.bf16.mxu0 0
    %261 = vmatpush1.bf16.msra.mxu0 %v240
    %262 = vmatprep.subr.bf16.mxu0 0
    %263 = vmatpush1.bf16.msra.mxu0 %v241
    %264 = vmatprep.subr.bf16.mxu0 0
    %265 = vmatpush1.bf16.msra.mxu0 %v242
    %266 = vmatprep.subr.bf16.mxu0 0
    %267 = vmatpush1.bf16.msra.mxu0 %v243
    %268 = vmatprep.subr.bf16.mxu0 0
    %269 = vmatpush1.bf16.msra.mxu0 0
    %270 = vmatprep.subr.bf16.mxu0 0
    %271 = vmatpush1.bf16.msra.mxu0 0
    %272 = vmatprep.subr.bf16.mxu0 0
    %273 = vmatpush1.bf16.msra.mxu0 0
    %274 = vmatprep.subr.bf16.mxu0 0
    %275 = vmatpush1.bf16.msra.mxu0 0
    %276 = vmatprep.subr.bf16.mxu0 0
    %277 = vmatpush1.bf16.msra.mxu0 0
    %278 = vmatprep.subr.bf16.mxu0 0
    %279 = vmatpush1.bf16.msra.mxu0 0
    %280 = vmatprep.subr.bf16.mxu0 0
    %281 = vmatpush1.bf16.msra.mxu0 0
    %282 = vmatprep.subr.bf16.mxu0 0
    %283 = vmatpush1.bf16.msra.mxu0 0
    %284 = vmatprep.mubr.bf16.mxu0 0
    %285 = vmatmul.mubr.bf16.gmra.mrb[0].mxu0 %v188
    %v286 = vpop.f32.mrb[0].mxu0
    %v287 = vadd.f32 %v79, %v286
    %v288 = vpop.f32.mrb[0].mxu0
    %v289 = vpop.f32.mrb[0].mxu0
    %v290 = vadd.f32 %v84, %v289
    %v291 = vpop.f32.mrb[0].mxu0
    %292 = vmatprep.mubr.bf16.mxu0 0
    %293 = vmatmul.mubr.bf16.gmra.mrb[0].mxu0 %v189
    %v294 = vpop.f32.mrb[0].mxu0
    %v295 = vadd.f32 %v89, %v294
    %v296 = vpop.f32.mrb[0].mxu0
    %v297 = vpop.f32.mrb[0].mxu0
    %v298 = vadd.f32 %v94, %v297
    %v299 = vpop.f32.mrb[0].mxu0
    %300 = vmatprep.mubr.bf16.mxu0 0
    %301 = vmatmul.mubr.bf16.gmra.mrb[0].mxu0 %v190
    %v302 = vpop.f32.mrb[0].mxu0
    %v303 = vadd.f32 %v99, %v302
    %v304 = vpop.f32.mrb[0].mxu0
    %v305 = vpop.f32.mrb[0].mxu0
    %v306 = vadd.f32 %v104, %v305
    %v307 = vpop.f32.mrb[0].mxu0
    %308 = vmatprep.mubr.bf16.mxu0 0
    %309 = vmatmul.mubr.bf16.gmra.mrb[0].mxu0 %v191
    %v310 = vpop.f32.mrb[0].mxu0
    %v311 = vadd.f32 %v109, %v310
    %v312 = vpop.f32.mrb[0].mxu0
    %v313 = vpop.f32.mrb[0].mxu0
    %v314 = vadd.f32 %v114, %v313
    %v315 = vpop.f32.mrb[0].mxu0
    %316 = vmatprep.mubr.bf16.mxu0 0
    %317 = vmatmul.mubr.bf16.gmra.mrb[0].mxu0 %v192
    %v318 = vpop.f32.mrb[0].mxu0
    %v319 = vadd.f32 %v119, %v318
    %v320 = vpop.f32.mrb[0].mxu0
    %v321 = vpop.f32.mrb[0].mxu0
    %v322 = vadd.f32 %v124, %v321
    %v323 = vpop.f32.mrb[0].mxu0
    %324 = vmatprep.mubr.bf16.mxu0 0
    %325 = vmatmul.mubr.bf16.gmra.mrb[0].mxu0 %v193
    %v326 = vpop.f32.mrb[0].mxu0
    %v327 = vadd.f32 %v129, %v326
    %v328 = vpop.f32.mrb[0].mxu0
    %v329 = vpop.f32.mrb[0].mxu0
    %v330 = vadd.f32 %v134, %v329
    %v331 = vpop.f32.mrb[0].mxu0
    %332 = vmatprep.mubr.bf16.mxu0 0
    %333 = vmatmul.mubr.bf16.gmra.mrb[0].mxu0 %v194
    %v334 = vpop.f32.mrb[0].mxu0
    %v335 = vadd.f32 %v139, %v334
    %v336 = vpop.f32.mrb[0].mxu0
    %v337 = vpop.f32.mrb[0].mxu0
    %v338 = vadd.f32 %v144, %v337
    %v339 = vpop.f32.mrb[0].mxu0
    %340 = vmatprep.mubr.bf16.mxu0 0
    %341 = vmatmul.mubr.bf16.gmra.mrb[0].mxu0 %v195
    %v342 = vpop.f32.mrb[0].mxu0
    %v343 = vadd.f32 %v149, %v342
    %v344 = vpop.f32.mrb[0].mxu0
    %v345 = vpop.f32.mrb[0].mxu0
    %v346 = vadd.f32 %v154, %v345
    %v347 = vpop.f32.mrb[0].mxu0
    %348 = vdwg.mxu0
    %v349 = vmax.f32 %v287, 0.0
    %v350 = vmax.f32 %v290, 0.0
    %v351 = vmax.f32 %v295, 0.0
    %v352 = vmax.f32 %v298, 0.0
    %v353 = vmax.f32 %v303, 0.0
    %v354 = vmax.f32 %v306, 0.0
    %v355 = vmax.f32 %v311, 0.0
    %v356 = vmax.f32 %v314, 0.0
    %v357 = vmax.f32 %v319, 0.0
    %v358 = vmax.f32 %v322, 0.0
    %v359 = vmax.f32 %v327, 0.0
    %v360 = vmax.f32 %v330, 0.0
    %v361 = vmax.f32 %v335, 0.0
    %v362 = vmax.f32 %v338, 0.0
    %v363 = vmax.f32 %v343, 0.0
    %v364 = vmax.f32 %v346, 0.0
    %v365 = vld [vmem:[%s3] sm:$0xf]
    %v366 = vld [vmem:[%s3 + $0x4] sm:$0xf]
    %v367 = vld [vmem:[%s3 + $0x8] sm:$0xf]
    %v368 = vld [vmem:[%s3 + $0xc] sm:$0xf]
    %v369 = vld [vmem:[%s3 + $0x10] sm:$0xf]
    %v370 = vld [vmem:[%s3 + $0x14] sm:$0xf]
    %v371 = vld [vmem:[%s3 + $0x18] sm:$0xf]
    %v372 = vld [vmem:[%s3 + $0x1c] sm:$0xf]
    %v373 = vld [vmem:[%s3 + $0x20] sm:$0xf]
    %v374 = vld [vmem:[%s3 + $0x24] sm:$0xf]
    %v375 = vld [vmem:[%s3 + $0x28] sm:$0xf]
    %v376 = vld [vmem:[%s3 + $0x2c] sm:$0xf]
    %v377 = vld [vmem:[%s3 + $0x30] sm:$0xf]
    %v378 = vld [vmem:[%s3 + $0x34] sm:$0xf]
    %v379 = vld [vmem:[%s3 + $0x38] sm:$0xf]
    %v380 = vld [vmem:[%s3 + $0x3c] sm:$0xf]
    %v381 = vld [vmem:[%s4] sm:$0xff]
    %v382 = vld [vmem:[%s4 + $0x8] sm:$0xff]
    %v383 = vld [vmem:[%s4 + $0x10] sm:$0xff]
    %v384 = vld [vmem:[%s4 + $0x18] sm:$0xff]
    %v385 = vld [vmem:[%s4 + $0x20] sm:$0xff]
    %v386 = vld [vmem:[%s4 + $0x28] sm:$0xff]
    %v387 = vld [vmem:[%s4 + $0x30] sm:$0xff]
    %v388 = vld [vmem:[%s4 + $0x38] sm:$0xff]
    %v389 = vld [vmem:[%s4 + $0x40] sm:$0xff]
    %v390 = vld [vmem:[%s4 + $0x48] sm:$0xff]
    %v391 = vld [vmem:[%s4 + $0x50] sm:$0xff]
    %v392 = vld [vmem:[%s4 + $0x58] sm:$0xff]
    %v393 = vld [vmem:[%s4 + $0x60] sm:$0xff]
    %v394 = vld [vmem:[%s4 + $0x68] sm:$0xff]
    %v395 = vld [vmem:[%s4 + $0x70] sm:$0xff]
    %v396 = vld [vmem:[%s4 + $0x78] sm:$0xff]
    %v397 = vpack.c.bf16 %v350, %v349
    %v398 = vpack.c.bf16 %v352, %v351
    %v399 = vpack.c.bf16 %v354, %v353
    %v400 = vpack.c.bf16 %v356, %v355
    %v401 = vpack.c.bf16 %v358, %v357
    %v402 = vpack.c.bf16 %v360, %v359
    %v403 = vpack.c.bf16 %v362, %v361
    %v404 = vpack.c.bf16 %v364, %v363
    %406 = vset.pattern.permute.xlu0 0
    %407 = vperm.xlu0 %406, %v381
    %v408 = vpop.permute.xlu0 %407
    %411 = vset.pattern.permute.xlu0 0
    %412 = vperm.xlu0 %411, %v382
    %v413 = vpop.permute.xlu0 %412
    %416 = vset.pattern.permute.xlu0 0
    %417 = vperm.xlu0 %416, %v383
    %v418 = vpop.permute.xlu0 %417
    %421 = vset.pattern.permute.xlu0 0
    %422 = vperm.xlu0 %421, %v384
    %v423 = vpop.permute.xlu0 %422
    %426 = vset.pattern.permute.xlu0 0
    %427 = vperm.xlu0 %426, %v385
    %v428 = vpop.permute.xlu0 %427
    %431 = vset.pattern.permute.xlu0 0
    %432 = vperm.xlu0 %431, %v386
    %v433 = vpop.permute.xlu0 %432
    %436 = vset.pattern.permute.xlu0 0
    %437 = vperm.xlu0 %436, %v387
    %v438 = vpop.permute.xlu0 %437
    %441 = vset.pattern.permute.xlu0 0
    %442 = vperm.xlu0 %441, %v388
    %v443 = vpop.permute.xlu0 %442
    %446 = vset.pattern.permute.xlu0 0
    %447 = vperm.xlu0 %446, %v389
    %v448 = vpop.permute.xlu0 %447
    %451 = vset.pattern.permute.xlu0 0
    %452 = vperm.xlu0 %451, %v390
    %v453 = vpop.permute.xlu0 %452
    %456 = vset.pattern.permute.xlu0 0
    %457 = vperm.xlu0 %456, %v391
    %v458 = vpop.permute.xlu0 %457
    %461 = vset.pattern.permute.xlu0 0
    %462 = vperm.xlu0 %461, %v392
    %v463 = vpop.permute.xlu0 %462
    %466 = vset.pattern.permute.xlu0 0
    %467 = vperm.xlu0 %466, %v393
    %v468 = vpop.permute.xlu0 %467
    %471 = vset.pattern.permute.xlu0 0
    %472 = vperm.xlu0 %471, %v394
    %v473 = vpop.permute.xlu0 %472
    %476 = vset.pattern.permute.xlu0 0
    %477 = vperm.xlu0 %476, %v395
    %v478 = vpop.permute.xlu0 %477
    %481 = vset.pattern.permute.xlu0 0
    %482 = vperm.xlu0 %481, %v396
    %v483 = vpop.permute.xlu0 %482
    %v501 = vunpack.c.l.b16 %v365
    %v502 = vunpack.c.l.b16 %v366
    %v503 = vunpack.c.l.b16 %v367
    %v504 = vunpack.c.l.b16 %v368
    %v505 = vunpack.c.l.b16 %v369
    %v506 = vunpack.c.l.b16 %v370
    %v507 = vunpack.c.l.b16 %v371
    %v508 = vunpack.c.l.b16 %v372
    %v509 = vunpack.c.l.b16 %v373
    %v510 = vunpack.c.l.b16 %v374
    %v511 = vunpack.c.l.b16 %v375
    %v512 = vunpack.c.l.b16 %v376
    %v513 = vunpack.c.l.b16 %v377
    %v514 = vunpack.c.l.b16 %v378
    %v515 = vunpack.c.l.b16 %v379
    %v516 = vunpack.c.l.b16 %v380
    %v517 = vpack.c.b16 %v502, %v501
    %v518 = vpack.c.b16 %v504, %v503
    %v519 = vpack.c.b16 %v506, %v505
    %v520 = vpack.c.b16 %v508, %v507
    %v521 = vpack.c.b16 %v510, %v509
    %v522 = vpack.c.b16 %v512, %v511
    %v523 = vpack.c.b16 %v514, %v513
    %v524 = vpack.c.b16 %v516, %v515
    %533 = vmatprep.subr.bf16.mxu0 0
    %534 = vmatpush1.bf16.msra.mxu0 %v397
    %535 = vmatprep.subr.bf16.mxu0 0
    %536 = vmatpush1.bf16.msra.mxu0 %v398
    %537 = vmatprep.subr.bf16.mxu0 0
    %538 = vmatpush1.bf16.msra.mxu0 %v399
    %539 = vmatprep.subr.bf16.mxu0 0
    %540 = vmatpush1.bf16.msra.mxu0 %v400
    %541 = vmatprep.subr.bf16.mxu0 0
    %542 = vmatpush1.bf16.msra.mxu0 %v401
    %543 = vmatprep.subr.bf16.mxu0 0
    %544 = vmatpush1.bf16.msra.mxu0 %v402
    %545 = vmatprep.subr.bf16.mxu0 0
    %546 = vmatpush1.bf16.msra.mxu0 %v403
    %547 = vmatprep.subr.bf16.mxu0 0
    %548 = vmatpush1.bf16.msra.mxu0 %v404
    %549 = vmatprep.subr.bf16.mxu0 0
    %550 = vmatpush1.bf16.msra.mxu0 0
    %551 = vmatprep.subr.bf16.mxu0 0
    %552 = vmatpush1.bf16.msra.mxu0 0
    %553 = vmatprep.subr.bf16.mxu0 0
    %554 = vmatpush1.bf16.msra.mxu0 0
    %555 = vmatprep.subr.bf16.mxu0 0
    %556 = vmatpush1.bf16.msra.mxu0 0
    %557 = vmatprep.subr.bf16.mxu0 0
    %558 = vmatpush1.bf16.msra.mxu0 0
    %559 = vmatprep.subr.bf16.mxu0 0
    %560 = vmatpush1.bf16.msra.mxu0 0
    %561 = vmatprep.subr.bf16.mxu0 0
    %562 = vmatpush1.bf16.msra.mxu0 0
    %563 = vmatprep.subr.bf16.mxu0 0
    %564 = vmatpush1.bf16.msra.mxu0 0
    %565 = vmatprep.mubr.bf16.mxu0 0
    %566 = vmatmul.mubr.bf16.gmra.mrb[0].mxu0 %v517
    %v567 = vpop.f32.mrb[0].mxu0
    %v568 = vadd.f32 %v408, %v567
    %v569 = vpop.f32.mrb[0].mxu0
    %v570 = vpop.f32.mrb[0].mxu0
    %v571 = vadd.f32 %v413, %v570
    %v572 = vpop.f32.mrb[0].mxu0
    %573 = vmatprep.mubr.bf16.mxu0 0
    %574 = vmatmul.mubr.bf16.gmra.mrb[0].mxu0 %v518
    %v575 = vpop.f32.mrb[0].mxu0
    %v576 = vadd.f32 %v418, %v575
    %v577 = vpop.f32.mrb[0].mxu0
    %v578 = vpop.f32.mrb[0].mxu0
    %v579 = vadd.f32 %v423, %v578
    %v580 = vpop.f32.mrb[0].mxu0
    %581 = vmatprep.mubr.bf16.mxu0 0
    %582 = vmatmul.mubr.bf16.gmra.mrb[0].mxu0 %v519
    %v583 = vpop.f32.mrb[0].mxu0
    %v584 = vadd.f32 %v428, %v583
    %v585 = vpop.f32.mrb[0].mxu0
    %v586 = vpop.f32.mrb[0].mxu0
    %v587 = vadd.f32 %v433, %v586
    %v588 = vpop.f32.mrb[0].mxu0
    %589 = vmatprep.mubr.bf16.mxu0 0
    %590 = vmatmul.mubr.bf16.gmra.mrb[0].mxu0 %v520
    %v591 = vpop.f32.mrb[0].mxu0
    %v592 = vadd.f32 %v438, %v591
    %v593 = vpop.f32.mrb[0].mxu0
    %v594 = vpop.f32.mrb[0].mxu0
    %v595 = vadd.f32 %v443, %v594
    %v596 = vpop.f32.mrb[0].mxu0
    %597 = vmatprep.mubr.bf16.mxu0 0
    %598 = vmatmul.mubr.bf16.gmra.mrb[0].mxu0 %v521
    %v599 = vpop.f32.mrb[0].mxu0
    %v600 = vadd.f32 %v448, %v599
    %v601 = vpop.f32.mrb[0].mxu0
    %v602 = vpop.f32.mrb[0].mxu0
    %v603 = vadd.f32 %v453, %v602
    %v604 = vpop.f32.mrb[0].mxu0
    %605 = vmatprep.mubr.bf16.mxu0 0
    %606 = vmatmul.mubr.bf16.gmra.mrb[0].mxu0 %v522
    %v607 = vpop.f32.mrb[0].mxu0
    %v608 = vadd.f32 %v458, %v607
    %v609 = vpop.f32.mrb[0].mxu0
    %v610 = vpop.f32.mrb[0].mxu0
    %v611 = vadd.f32 %v463, %v610
    %v612 = vpop.f32.mrb[0].mxu0
    %613 = vmatprep.mubr.bf16.mxu0 0
    %614 = vmatmul.mubr.bf16.gmra.mrb[0].mxu0 %v523
    %v615 = vpop.f32.mrb[0].mxu0
    %v616 = vadd.f32 %v468, %v615
    %v617 = vpop.f32.mrb[0].mxu0
    %v618 = vpop.f32.mrb[0].mxu0
    %v619 = vadd.f32 %v473, %v618
    %v620 = vpop.f32.mrb[0].mxu0
    %621 = vmatprep.mubr.bf16.mxu0 0
    %622 = vmatmul.mubr.bf16.gmra.mrb[0].mxu0 %v524
    %v623 = vpop.f32.mrb[0].mxu0
    %v624 = vadd.f32 %v478, %v623
    %v625 = vpop.f32.mrb[0].mxu0
    %v626 = vpop.f32.mrb[0].mxu0
    %v627 = vadd.f32 %v483, %v626
    %v628 = vpop.f32.mrb[0].mxu0
    %629 = vdwg.mxu0
    %v630 = vmax.f32 %v568, 0.0
    %v631 = vmax.f32 %v571, 0.0
    %v632 = vmax.f32 %v576, 0.0
    %v633 = vmax.f32 %v579, 0.0
    %v634 = vmax.f32 %v584, 0.0
    %v635 = vmax.f32 %v587, 0.0
    %v636 = vmax.f32 %v592, 0.0
    %v637 = vmax.f32 %v595, 0.0
    %v638 = vmax.f32 %v600, 0.0
    %v639 = vmax.f32 %v603, 0.0
    %v640 = vmax.f32 %v608, 0.0
    %v641 = vmax.f32 %v611, 0.0
    %v642 = vmax.f32 %v616, 0.0
    %v643 = vmax.f32 %v619, 0.0
    %v644 = vmax.f32 %v624, 0.0
    %v645 = vmax.f32 %v627, 0.0
    %v646 = vld [vmem:[%s5] sm:$0xf]
    %v647 = vld [vmem:[%s6] sm:$0xff]
    %v648 = vpack.c.bf16 %v631, %v630
    %v649 = vpack.c.bf16 %v633, %v632
    %v650 = vpack.c.bf16 %v635, %v634
    %v651 = vpack.c.bf16 %v637, %v636
    %v652 = vpack.c.bf16 %v639, %v638
    %v653 = vpack.c.bf16 %v641, %v640
    %v654 = vpack.c.bf16 %v643, %v642
    %v655 = vpack.c.bf16 %v645, %v644
    %657 = vset.pattern.permute.xlu0 0
    %658 = vperm.xlu0 %657, %v647
    %v659 = vpop.permute.xlu0 %658
    %661 = vmatprep.subr.bf16.mxu0 0
    %662 = vmatpush1.bf16.msra.mxu0 %v648
    %663 = vmatprep.subr.bf16.mxu0 0
    %664 = vmatpush1.bf16.msra.mxu0 %v649
    %665 = vmatprep.subr.bf16.mxu0 0
    %666 = vmatpush1.bf16.msra.mxu0 %v650
    %667 = vmatprep.subr.bf16.mxu0 0
    %668 = vmatpush1.bf16.msra.mxu0 %v651
    %669 = vmatprep.subr.bf16.mxu0 0
    %670 = vmatpush1.bf16.msra.mxu0 %v652
    %671 = vmatprep.subr.bf16.mxu0 0
    %672 = vmatpush1.bf16.msra.mxu0 %v653
    %673 = vmatprep.subr.bf16.mxu0 0
    %674 = vmatpush1.bf16.msra.mxu0 %v654
    %675 = vmatprep.subr.bf16.mxu0 0
    %676 = vmatpush1.bf16.msra.mxu0 %v655
    %677 = vmatprep.subr.bf16.mxu0 0
    %678 = vmatpush1.bf16.msra.mxu0 0
    %679 = vmatprep.subr.bf16.mxu0 0
    %680 = vmatpush1.bf16.msra.mxu0 0
    %681 = vmatprep.subr.bf16.mxu0 0
    %682 = vmatpush1.bf16.msra.mxu0 0
    %683 = vmatprep.subr.bf16.mxu0 0
    %684 = vmatpush1.bf16.msra.mxu0 0
    %685 = vmatprep.subr.bf16.mxu0 0
    %686 = vmatpush1.bf16.msra.mxu0 0
    %687 = vmatprep.subr.bf16.mxu0 0
    %688 = vmatpush1.bf16.msra.mxu0 0
    %689 = vmatprep.subr.bf16.mxu0 0
    %690 = vmatpush1.bf16.msra.mxu0 0
    %691 = vmatprep.subr.bf16.mxu0 0
    %692 = vmatpush1.bf16.msra.mxu0 0
    %693 = vmatprep.mubr.bf16.mxu0 0
    %694 = vmatmul.mubr.bf16.gmra.mrb[0].mxu0 %v646
    %v695 = vpop.f32.mrb[0].mxu0
    %v696 = vadd.f32 %v659, %v695
    %v697 = vpop.f32.mrb[0].mxu0
    %v698 = vpop.f32.mrb[0].mxu0
    %v699 = vpop.f32.mrb[0].mxu0
    %700 = vdwg.mxu0
    %701 = vst [vmem:[#allocation2] sm:$0x1] %v696
    // Predicated region
    $region30: #{tpu_custom_call.1} parent=1 // pred_check
      _
    $region31: #{tpu_custom_call.1} parent=1 // pred_check_branch
      %703 = sbr.rel (0) target = $region33
    $region32: #{tpu_custom_call.1} parent=1 // pred_region
      %s705 = ssub.s32 16, 16
      %706 = vsyncadd [#allocation3], %s705
      %s708 = sshll.u32 [#allocation2], 4
      %s709 = int_to_ptr.vmem [resolvable:$true] %s708
      %711 = dma.vmem_to_hbm [thread:$0]  %s709, 16, %s7, [#allocation3]
    $region33: #{tpu_custom_call.1} parent=1 // pred_fallthru
      _
    // Predicated region
    $region34: #{tpu_custom_call.1} parent=1 // pred_check
      _
    $region35: #{tpu_custom_call.1} parent=1 // pred_check_branch
      %713 = sbr.rel (0) target = $region37
    $region36: #{tpu_custom_call.1} parent=1 // pred_region
      %714 = dma.done [#allocation3], 16
    $region37: #{tpu_custom_call.1} parent=1 // pred_fallthru
      _
    %715 = vsyncpa [#allocation3], 1

</llo_original>
